<compile_context>
chip_gen: v5e
topology: v5e:2x2
jax: 0.10.0
libtpu: 0.0.40
codegen_flags: <defaults>
</compile_context>

<pallas_src>
import functools

import jax
import jax.numpy as jnp
from jax.experimental import pallas as pl
from jax.experimental.pallas import tpu as pltpu


def _round_up(x, m):
    return (x + m - 1) // m * m


def _full_spec(shape):
    # Block == full array shape (the (8,128) divisibility rule is waived) with a
    # constant index map, so weights/biases stay resident across grid steps.
    return pl.BlockSpec(shape, lambda i: (0,) * len(shape))


@functools.partial(
    jax.jit,
    static_argnames=("return_hidden_feature", "block_n", "use_bf16_inputs"),
)
def potentialnet_fc_forward(x, params, return_hidden_feature=False,
                            block_n=1024, use_bf16_inputs=False):
    """Pallas implementation of PotentialNetFullyConnected.forward.

    x:      [N, in_channels] float32
    params: dict with 'w0','b0','w1','b1','w2','b2'; weights are [C_in, C_out].
    Returns `output(x)` or, if return_hidden_feature,
    `(output[:-2](x), output[:-4](x), output(x))` (PyTorch ordering).
    """
    n, c_in = x.shape
    out_dtype = x.dtype
    w0, b0 = params["w0"], params["b0"]
    w1, b1 = params["w1"], params["b1"]
    w2, b2 = params["w2"], params["b2"]
    h0_dim, h1_dim, out_dim = w0.shape[1], w1.shape[1], w2.shape[1]

    # ---- lane padding: every feature axis rounded up to a multiple of 128 ----
    c_in_p = _round_up(c_in, 128)
    h0_p = _round_up(h0_dim, 128)
    h1_p = _round_up(h1_dim, 128)
    out_p = _round_up(out_dim, 128)

    in_dtype = jnp.bfloat16 if use_bf16_inputs else out_dtype

    def _pad2(a, rows, cols, dtype):
        a = a if a.ndim == 2 else a.reshape(1, -1)
        a = jnp.pad(a, ((0, rows - a.shape[0]), (0, cols - a.shape[1])))
        return a.astype(dtype)

    w0p = _pad2(w0, c_in_p, h0_p, in_dtype)
    w1p = _pad2(w1, h0_p, h1_p, in_dtype)
    w2p = _pad2(w2, h1_p, out_p, in_dtype)
    b0p = _pad2(b0, 1, h0_p, jnp.float32)
    b1p = _pad2(b1, 1, h1_p, jnp.float32)
    b2p = _pad2(b2, 1, out_p, jnp.float32)

    # Single lane-dense output slab; hidden sections only exist when requested.
    slab_w = out_p + (h0_p + h1_p if return_hidden_feature else 0)

    # ---- batch tile: VMEM-limited max (double-buffered x tile + out slab) ----
    in_isz = jnp.dtype(in_dtype).itemsize
    out_isz = jnp.dtype(out_dtype).itemsize
    per_row = 2 * (c_in_p * in_isz + slab_w * out_isz)   # 2x = double-buffering
    budget = 12 * 1024 * 1024                            # leave compiler headroom
    blk = min(int(block_n), max(8, budget // per_row), _round_up(n, 8))
    blk = max(8, (blk // 8) * 8)                          # 8-sublane aligned
    n_pad = _round_up(n, blk)

    xp = jnp.pad(x, ((0, n_pad - n), (0, c_in_p - c_in))).astype(in_dtype)

    def kernel(x_ref, w0_ref, b0_ref, w1_ref, b1_ref, w2_ref, b2_ref, out_ref):
        xt = x_ref[...]
        # Linear 0 (pre-ReLU hidden == output[:-4](x))
        h0 = jnp.dot(xt, w0_ref[...],
                     preferred_element_type=jnp.float32) + b0_ref[...]
        a0 = jnp.maximum(h0, 0.0).astype(w1_ref.dtype)
        # Linear 1 (pre-ReLU hidden == output[:-2](x))
        h1 = jnp.dot(a0, w1_ref[...],
                     preferred_element_type=jnp.float32) + b1_ref[...]
        a1 = jnp.maximum(h1, 0.0).astype(w2_ref.dtype)
        # Linear 2 (final output)
        o = jnp.dot(a1, w2_ref[...],
                    preferred_element_type=jnp.float32) + b2_ref[...]
        out_ref[:, :out_p] = o.astype(out_ref.dtype)
        if return_hidden_feature:                 # static specialization
            out_ref[:, out_p:out_p + h0_p] = h0.astype(out_ref.dtype)
            out_ref[:, out_p + h0_p:] = h1.astype(out_ref.dtype)

    grid = (n_pad // blk,)
    slab = pl.pallas_call(
        kernel,
        out_shape=jax.ShapeDtypeStruct((n_pad, slab_w), out_dtype),
        grid_spec=pltpu.PrefetchScalarGridSpec(
            num_scalar_prefetch=0,
            grid=grid,
            in_specs=[
                pl.BlockSpec((blk, c_in_p), lambda i: (i, 0)),   # x tile
                _full_spec(w0p.shape), _full_spec(b0p.shape),
                _full_spec(w1p.shape), _full_spec(b1p.shape),
                _full_spec(w2p.shape), _full_spec(b2p.shape),
            ],
            out_specs=pl.BlockSpec((blk, slab_w), lambda i: (i, 0)),
        ),
        compiler_params=pltpu.CompilerParams(
            dimension_semantics=("parallel",),     # shards grid across v7x TCs
            vmem_limit_bytes=48 * 1024 * 1024,     # safe vs v7x 64 MiB physical
        ),
    )(xp, w0p, b0p, w1p, b1p, w2p, b2p)

    out = slab[:n, :out_dim]
    if return_hidden_feature:
        hid0 = slab[:n, out_p:out_p + h0_dim]
        hid1 = slab[:n, out_p + h0_p:out_p + h0_p + h1_dim]
        # PyTorch order: (output[:-2](x), output[:-4](x), output(x))
        return hid1, hid0, out
    return out


def init_params(key, in_channels, out_channels, dtype=jnp.float32):
    """Deterministic synthetic parameters with the module's shapes."""
    h0 = int(in_channels / 1.5)
    h1 = int(in_channels / 2)
    dims = [(in_channels, h0), (h0, h1), (h1, out_channels)]
    params = {}
    for idx, (ci, co) in enumerate(dims):
        key, kw, kb = jax.random.split(key, 3)
        bound = 1.0 / jnp.sqrt(ci)  # PyTorch Linear default-ish scale
        params[f"w{idx}"] = jax.random.uniform(
            kw, (ci, co), dtype, minval=-bound, maxval=bound)
        params[f"b{idx}"] = jax.random.uniform(
            kb, (1, co), dtype, minval=-bound, maxval=bound)
    return params


def _reference(x, params):
    h0 = x @ params["w0"] + params["b0"]
    a0 = jnp.maximum(h0, 0.0)
    h1 = a0 @ params["w1"] + params["b1"]
    a1 = jnp.maximum(h1, 0.0)
    out = a1 @ params["w2"] + params["b2"]
    return h1, h0, out


if __name__ == "__main__":
    in_channels, out_channels = 32, 4   # -> hidden dims 21 and 16
    batch = 10                          # deliberately NOT a multiple of 8

    key = jax.random.PRNGKey(0)
    kx, kp = jax.random.split(key)
    x = jax.random.normal(kx, (batch, in_channels), jnp.float32)
    params = init_params(kp, in_channels, out_channels)

    # Default path: hidden features are never computed or written to HBM.
    out = potentialnet_fc_forward(x, params, return_hidden_feature=False)
    out = jax.block_until_ready(out)

    # Hidden-feature path (single packed output slab).
    hid1, hid0, out2 = potentialnet_fc_forward(
        x, params, return_hidden_feature=True)
    jax.block_until_ready((hid1, hid0, out2))

    # Larger batch exercising multi-step grid + batch padding.
    xb = jax.random.normal(kx, (300, in_channels), jnp.float32)
    outb = jax.block_until_ready(
        potentialnet_fc_forward(xb, params, block_n=128))

    # Optional bf16-MXU path (v6e/v7x oriented) — smoke test only.
    out_bf16 = jax.block_until_ready(
        potentialnet_fc_forward(x, params, use_bf16_inputs=True))
    assert bool(jnp.isfinite(out_bf16).all()) and out_bf16.shape == out.shape

    # Check against a pure-JAX reference.
    ref_h1, ref_h0, ref_out = _reference(x, params)
    _, _, ref_outb = _reference(xb, params)
    assert jnp.allclose(out, ref_out, atol=1e-4), "final output mismatch"
    assert jnp.allclose(out2, ref_out, atol=1e-4), "final output mismatch (hidden path)"
    assert jnp.allclose(hid0, ref_h0, atol=1e-4), "hidden feature 0 mismatch"
    assert jnp.allclose(hid1, ref_h1, atol=1e-4), "hidden feature 1 mismatch"
    assert jnp.allclose(outb, ref_outb, atol=1e-4), "batched output mismatch"

    print("KERNEL_OK")
</pallas_src>

<mosaic_0001>
module attributes {stable_mosaic.version = 11 : i64} {
  func.func @kernel(%arg0: i32, %arg1: memref<16x128xf32, #tpu.memory_space<vmem>>, %arg2: memref<128x128xf32, #tpu.memory_space<vmem>>, %arg3: memref<1x128xf32, #tpu.memory_space<vmem>>, %arg4: memref<128x128xf32, #tpu.memory_space<vmem>>, %arg5: memref<1x128xf32, #tpu.memory_space<vmem>>, %arg6: memref<128x128xf32, #tpu.memory_space<vmem>>, %arg7: memref<1x128xf32, #tpu.memory_space<vmem>>, %arg8: memref<16x128xf32, #tpu.memory_space<vmem>>) attributes {dimension_semantics = [#tpu.dimension_semantics<parallel>], iteration_bounds = array<i64: 1>, scalar_prefetch = 0 : i64, scratch_operands = 0 : i64, tpu.core_type = #tpu.core_type<tc>, window_params = [{transform_indices = @transform_0, window_bounds = array<i64: 16, 128>}, {pipeline_mode = #tpu.pipeline_mode<synchronous>, transform_indices = @transform_1, window_bounds = array<i64: 128, 128>}, {pipeline_mode = #tpu.pipeline_mode<synchronous>, transform_indices = @transform_2, window_bounds = array<i64: 1, 128>}, {pipeline_mode = #tpu.pipeline_mode<synchronous>, transform_indices = @transform_3, window_bounds = array<i64: 128, 128>}, {pipeline_mode = #tpu.pipeline_mode<synchronous>, transform_indices = @transform_4, window_bounds = array<i64: 1, 128>}, {pipeline_mode = #tpu.pipeline_mode<synchronous>, transform_indices = @transform_5, window_bounds = array<i64: 128, 128>}, {pipeline_mode = #tpu.pipeline_mode<synchronous>, transform_indices = @transform_6, window_bounds = array<i64: 1, 128>}, {transform_indices = @transform_7, window_bounds = array<i64: 16, 128>}]} {
    %c0 = arith.constant 0 : index
    %c0_0 = arith.constant 0 : index
    %0 = vector.load %arg1[%c0, %c0_0] : memref<16x128xf32, #tpu.memory_space<vmem>>, vector<16x128xf32>
    %c0_1 = arith.constant 0 : index
    %c0_2 = arith.constant 0 : index
    %1 = vector.load %arg2[%c0_1, %c0_2] : memref<128x128xf32, #tpu.memory_space<vmem>>, vector<128x128xf32>
    %cst = arith.constant dense<0.000000e+00> : vector<16x128xf32>
    %2 = tpu.matmul %0, %1, %cst {dimension_numbers = #tpu.dot_dimension_numbers<[1], [0], [0], [1], [0, 0, 1, 1], [], []>} : vector<16x128xf32>, vector<128x128xf32>, vector<16x128xf32> -> vector<16x128xf32>
    %c0_3 = arith.constant 0 : index
    %c0_4 = arith.constant 0 : index
    %3 = vector.load %arg3[%c0_3, %c0_4] : memref<1x128xf32, #tpu.memory_space<vmem>>, vector<1x128xf32>
    %4 = vector.broadcast %3 : vector<1x128xf32> to vector<16x128xf32>
    %5 = arith.addf %2, %4 : vector<16x128xf32>
    %cst_5 = arith.constant 0.000000e+00 : f32
    %6 = vector.broadcast %cst_5 : f32 to vector<16x128xf32>
    %7 = arith.maximumf %5, %6 : vector<16x128xf32>
    %c0_6 = arith.constant 0 : index
    %c0_7 = arith.constant 0 : index
    %8 = vector.load %arg4[%c0_6, %c0_7] : memref<128x128xf32, #tpu.memory_space<vmem>>, vector<128x128xf32>
    %cst_8 = arith.constant dense<0.000000e+00> : vector<16x128xf32>
    %9 = tpu.matmul %7, %8, %cst_8 {dimension_numbers = #tpu.dot_dimension_numbers<[1], [0], [0], [1], [0, 0, 1, 1], [], []>} : vector<16x128xf32>, vector<128x128xf32>, vector<16x128xf32> -> vector<16x128xf32>
    %c0_9 = arith.constant 0 : index
    %c0_10 = arith.constant 0 : index
    %10 = vector.load %arg5[%c0_9, %c0_10] : memref<1x128xf32, #tpu.memory_space<vmem>>, vector<1x128xf32>
    %11 = vector.broadcast %10 : vector<1x128xf32> to vector<16x128xf32>
    %12 = arith.addf %9, %11 : vector<16x128xf32>
    %cst_11 = arith.constant 0.000000e+00 : f32
    %13 = vector.broadcast %cst_11 : f32 to vector<16x128xf32>
    %14 = arith.maximumf %12, %13 : vector<16x128xf32>
    %c0_12 = arith.constant 0 : index
    %c0_13 = arith.constant 0 : index
    %15 = vector.load %arg6[%c0_12, %c0_13] : memref<128x128xf32, #tpu.memory_space<vmem>>, vector<128x128xf32>
    %cst_14 = arith.constant dense<0.000000e+00> : vector<16x128xf32>
    %16 = tpu.matmul %14, %15, %cst_14 {dimension_numbers = #tpu.dot_dimension_numbers<[1], [0], [0], [1], [0, 0, 1, 1], [], []>} : vector<16x128xf32>, vector<128x128xf32>, vector<16x128xf32> -> vector<16x128xf32>
    %c0_15 = arith.constant 0 : index
    %c0_16 = arith.constant 0 : index
    %17 = vector.load %arg7[%c0_15, %c0_16] : memref<1x128xf32, #tpu.memory_space<vmem>>, vector<1x128xf32>
    %18 = vector.broadcast %17 : vector<1x128xf32> to vector<16x128xf32>
    %19 = arith.addf %16, %18 : vector<16x128xf32>
    %c0_17 = arith.constant 0 : index
    %c0_18 = arith.constant 0 : index
    %20 = vector.load %arg8[%c0_17, %c0_18] : memref<16x128xf32, #tpu.memory_space<vmem>>, vector<16x128xf32>
    tpu.vector_store %arg8[%c0_17, %c0_18], %19 {strides = array<i32>} : memref<16x128xf32, #tpu.memory_space<vmem>>, vector<16x128xf32>,
    return
  }
  func.func @transform_0(%arg0: i32) -> (i32, i32) {
    %c0_i32 = arith.constant 0 : i32
    %c0_i32_0 = arith.constant 0 : i32
    return %arg0, %c0_i32 : i32, i32
  }
  func.func @transform_1(%arg0: i32) -> (i32, i32) {
    %c0_i32 = arith.constant 0 : i32
    %c0_i32_0 = arith.constant 0 : i32
    %c0_i32_1 = arith.constant 0 : i32
    return %c0_i32, %c0_i32_0 : i32, i32
  }
  func.func @transform_2(%arg0: i32) -> (i32, i32) {
    %c0_i32 = arith.constant 0 : i32
    %c0_i32_0 = arith.constant 0 : i32
    %c0_i32_1 = arith.constant 0 : i32
    return %c0_i32, %c0_i32_0 : i32, i32
  }
  func.func @transform_3(%arg0: i32) -> (i32, i32) {
    %c0_i32 = arith.constant 0 : i32
    %c0_i32_0 = arith.constant 0 : i32
    %c0_i32_1 = arith.constant 0 : i32
    return %c0_i32, %c0_i32_0 : i32, i32
  }
  func.func @transform_4(%arg0: i32) -> (i32, i32) {
    %c0_i32 = arith.constant 0 : i32
    %c0_i32_0 = arith.constant 0 : i32
    %c0_i32_1 = arith.constant 0 : i32
    return %c0_i32, %c0_i32_0 : i32, i32
  }
  func.func @transform_5(%arg0: i32) -> (i32, i32) {
    %c0_i32 = arith.constant 0 : i32
    %c0_i32_0 = arith.constant 0 : i32
    %c0_i32_1 = arith.constant 0 : i32
    return %c0_i32, %c0_i32_0 : i32, i32
  }
  func.func @transform_6(%arg0: i32) -> (i32, i32) {
    %c0_i32 = arith.constant 0 : i32
    %c0_i32_0 = arith.constant 0 : i32
    %c0_i32_1 = arith.constant 0 : i32
    return %c0_i32, %c0_i32_0 : i32, i32
  }
  func.func @transform_7(%arg0: i32) -> (i32, i32) {
    %c0_i32 = arith.constant 0 : i32
    %c0_i32_0 = arith.constant 0 : i32
    return %arg0, %c0_i32 : i32, i32
  }
}

</mosaic_0001>

<llo_original>
// kernel: potentialnet_fc_forward.1
$region0: #{potentialnet_fc_forward.1}
  #allocation0 [shape = 'u32[]', space=smem, size = 0x4, offset = 0x4, fixed_abs, tag = 'smem constant byte address 0x4 - core index']
  #allocation1 [shape = 'u32[72,128]{1,0:T(1,128)}', space=vmem, size = 0x9000, scoped, tag = 'internal scratch']
  %s0 = inlined_call_operand.vmem [shape: f32[16,128], index: 0, kind: input, shape index: {}]
  %s1 = inlined_call_operand.vmem [shape: f32[128,128], index: 1, kind: input, shape index: {}]
  %s2 = inlined_call_operand.vmem [shape: f32[1,128], index: 2, kind: input, shape index: {}]
  %s3 = inlined_call_operand.vmem [shape: f32[128,128], index: 3, kind: input, shape index: {}]
  %s4 = inlined_call_operand.vmem [shape: f32[1,128], index: 4, kind: input, shape index: {}]
  %s5 = inlined_call_operand.vmem [shape: f32[128,128], index: 5, kind: input, shape index: {}]
  %s6 = inlined_call_operand.vmem [shape: f32[1,128], index: 6, kind: input, shape index: {}]
  %s7 = inlined_call_operand.vmem [shape: f32[16,128], index: 7, kind: output, shape index: {}]
  %s8 = sld [smem:[#allocation0]]
  $region38: #{potentialnet_fc_forward.1} parent=0
    _
  %s10 = ssub.s32 1, %s8
  %s11 = scalar_select 0, %s10, %s8
  // Predicated region
  $region2: #{potentialnet_fc_forward.1} parent=0 // pred_check
    _
  $region3: #{potentialnet_fc_forward.1} parent=0 // pred_check_branch
    %13 = sbr.rel (0) target = $region5
  $region4: #{potentialnet_fc_forward.1} parent=0 // pred_region
    _
  $region5: #{potentialnet_fc_forward.1} parent=0 // pred_fallthru
    _
  // Predicated region
  $region6: #{potentialnet_fc_forward.1} parent=0 // pred_check
    _
  $region7: #{potentialnet_fc_forward.1} parent=0 // pred_check_branch
    %15 = sbr.rel (0) target = $region9
  $region8: #{potentialnet_fc_forward.1} parent=0 // pred_region
    _
  $region9: #{potentialnet_fc_forward.1} parent=0 // pred_fallthru
    _
  // Predicated region
  $region10: #{potentialnet_fc_forward.1} parent=0 // pred_check
    _
  $region11: #{potentialnet_fc_forward.1} parent=0 // pred_check_branch
    %17 = sbr.rel (0) target = $region13
  $region12: #{potentialnet_fc_forward.1} parent=0 // pred_region
    _
  $region13: #{potentialnet_fc_forward.1} parent=0 // pred_fallthru
    _
  // Predicated region
  $region14: #{potentialnet_fc_forward.1} parent=0 // pred_check
    _
  $region15: #{potentialnet_fc_forward.1} parent=0 // pred_check_branch
    %19 = sbr.rel (0) target = $region17
  $region16: #{potentialnet_fc_forward.1} parent=0 // pred_region
    _
  $region17: #{potentialnet_fc_forward.1} parent=0 // pred_fallthru
    _
  // Predicated region
  $region18: #{potentialnet_fc_forward.1} parent=0 // pred_check
    _
  $region19: #{potentialnet_fc_forward.1} parent=0 // pred_check_branch
    %21 = sbr.rel (0) target = $region21
  $region20: #{potentialnet_fc_forward.1} parent=0 // pred_region
    _
  $region21: #{potentialnet_fc_forward.1} parent=0 // pred_fallthru
    _
  // Predicated region
  $region22: #{potentialnet_fc_forward.1} parent=0 // pred_check
    _
  $region23: #{potentialnet_fc_forward.1} parent=0 // pred_check_branch
    %23 = sbr.rel (0) target = $region25
  $region24: #{potentialnet_fc_forward.1} parent=0 // pred_region
    _
  $region25: #{potentialnet_fc_forward.1} parent=0 // pred_fallthru
    _
  // Predicated region
  $region26: #{potentialnet_fc_forward.1} parent=0 // pred_check
    _
  $region27: #{potentialnet_fc_forward.1} parent=0 // pred_check_branch
    %25 = sbr.rel (0) target = $region29
  $region28: #{potentialnet_fc_forward.1} parent=0 // pred_region
    _
  $region29: #{potentialnet_fc_forward.1} parent=0 // pred_fallthru
    _
  %v26 = vld [vmem:[%s0] sm:$0xff]
  %v27 = vld [vmem:[%s0 + $0x8] sm:$0xff]
  %v28 = vld [vmem:[%s1] sm:$0xff]
  %v29 = vld [vmem:[%s1 + $0x8] sm:$0xff]
  %v30 = vld [vmem:[%s1 + $0x10] sm:$0xff]
  %v31 = vld [vmem:[%s1 + $0x18] sm:$0xff]
  %v32 = vld [vmem:[%s1 + $0x20] sm:$0xff]
  %v33 = vld [vmem:[%s1 + $0x28] sm:$0xff]
  %v34 = vld [vmem:[%s1 + $0x30] sm:$0xff]
  %v35 = vld [vmem:[%s1 + $0x38] sm:$0xff]
  %v36 = vld [vmem:[%s1 + $0x40] sm:$0xff]
  %v37 = vld [vmem:[%s1 + $0x48] sm:$0xff]
  %v38 = vld [vmem:[%s1 + $0x50] sm:$0xff]
  %v39 = vld [vmem:[%s1 + $0x58] sm:$0xff]
  %v40 = vld [vmem:[%s1 + $0x60] sm:$0xff]
  %v41 = vld [vmem:[%s1 + $0x68] sm:$0xff]
  %v42 = vld [vmem:[%s1 + $0x70] sm:$0xff]
  %v43 = vld [vmem:[%s1 + $0x78] sm:$0xff]
  %v44 = vld [vmem:[%s2] sm:$0x1]
  %v46 = vperm.slane %v44, 0
  %48 = vmatpush.msra.mxu0 %v43
  %49 = vmatpush.msra.mxu0 %v42
  %50 = vmatpush.msra.mxu0 %v41
  %51 = vmatpush.msra.mxu0 %v40
  %52 = vmatpush.msra.mxu0 %v39
  %53 = vmatpush.msra.mxu0 %v38
  %54 = vmatpush.msra.mxu0 %v37
  %55 = vmatpush.msra.mxu0 %v36
  %56 = vmatpush.msra.mxu0 %v35
  %57 = vmatpush.msra.mxu0 %v34
  %58 = vmatpush.msra.mxu0 %v33
  %59 = vmatpush.msra.mxu0 %v32
  %60 = vmatpush.msra.mxu0 %v31
  %61 = vmatpush.msra.mxu0 %v30
  %62 = vmatpush.msra.mxu0 %v29
  %63 = vmatpush.msra.mxu0 %v28
  %64 = vmatmul.f32.gmra.mxu0 %v26
  %v65 = vpop.f32.mrf.mxu0
  %v66 = vadd.f32 %v46, %v65
  %67 = vmatmul.f32.gmra.mxu0 %v27
  %v68 = vpop.f32.mrf.mxu0
  %v69 = vadd.f32 %v46, %v68
  %70 = vdwg.mxu0
  %v71 = vmax.f32 %v66, 0.0
  %v72 = vmax.f32 %v69, 0.0
  %v73 = vld [vmem:[%s3] sm:$0xff]
  %v74 = vld [vmem:[%s3 + $0x8] sm:$0xff]
  %v75 = vld [vmem:[%s3 + $0x10] sm:$0xff]
  %v76 = vld [vmem:[%s3 + $0x18] sm:$0xff]
  %v77 = vld [vmem:[%s3 + $0x20] sm:$0xff]
  %v78 = vld [vmem:[%s3 + $0x28] sm:$0xff]
  %v79 = vld [vmem:[%s3 + $0x30] sm:$0xff]
  %v80 = vld [vmem:[%s3 + $0x38] sm:$0xff]
  %v81 = vld [vmem:[%s3 + $0x40] sm:$0xff]
  %v82 = vld [vmem:[%s3 + $0x48] sm:$0xff]
  %v83 = vld [vmem:[%s3 + $0x50] sm:$0xff]
  %v84 = vld [vmem:[%s3 + $0x58] sm:$0xff]
  %v85 = vld [vmem:[%s3 + $0x60] sm:$0xff]
  %v86 = vld [vmem:[%s3 + $0x68] sm:$0xff]
  %v87 = vld [vmem:[%s3 + $0x70] sm:$0xff]
  %v88 = vld [vmem:[%s3 + $0x78] sm:$0xff]
  %v89 = vld [vmem:[%s4] sm:$0x1]
  %v91 = vperm.slane %v89, 0
  %93 = vmatpush.msra.mxu0 %v88
  %94 = vmatpush.msra.mxu0 %v87
  %95 = vmatpush.msra.mxu0 %v86
  %96 = vmatpush.msra.mxu0 %v85
  %97 = vmatpush.msra.mxu0 %v84
  %98 = vmatpush.msra.mxu0 %v83
  %99 = vmatpush.msra.mxu0 %v82
  %100 = vmatpush.msra.mxu0 %v81
  %101 = vmatpush.msra.mxu0 %v80
  %102 = vmatpush.msra.mxu0 %v79
  %103 = vmatpush.msra.mxu0 %v78
  %104 = vmatpush.msra.mxu0 %v77
  %105 = vmatpush.msra.mxu0 %v76
  %106 = vmatpush.msra.mxu0 %v75
  %107 = vmatpush.msra.mxu0 %v74
  %108 = vmatpush.msra.mxu0 %v73
  %109 = vmatmul.f32.gmra.mxu0 %v71
  %v110 = vpop.f32.mrf.mxu0
  %v111 = vadd.f32 %v91, %v110
  %112 = vmatmul.f32.gmra.mxu0 %v72
  %v113 = vpop.f32.mrf.mxu0
  %v114 = vadd.f32 %v91, %v113
  %115 = vdwg.mxu0
  %v116 = vmax.f32 %v111, 0.0
  %v117 = vmax.f32 %v114, 0.0
  %v118 = vld [vmem:[%s5] sm:$0xff]
  %v119 = vld [vmem:[%s5 + $0x8] sm:$0xff]
  %v120 = vld [vmem:[%s5 + $0x10] sm:$0xff]
  %v121 = vld [vmem:[%s5 + $0x18] sm:$0xff]
  %v122 = vld [vmem:[%s5 + $0x20] sm:$0xff]
  %v123 = vld [vmem:[%s5 + $0x28] sm:$0xff]
  %v124 = vld [vmem:[%s5 + $0x30] sm:$0xff]
  %v125 = vld [vmem:[%s5 + $0x38] sm:$0xff]
  %v126 = vld [vmem:[%s5 + $0x40] sm:$0xff]
  %v127 = vld [vmem:[%s5 + $0x48] sm:$0xff]
  %v128 = vld [vmem:[%s5 + $0x50] sm:$0xff]
  %v129 = vld [vmem:[%s5 + $0x58] sm:$0xff]
  %v130 = vld [vmem:[%s5 + $0x60] sm:$0xff]
  %v131 = vld [vmem:[%s5 + $0x68] sm:$0xff]
  %v132 = vld [vmem:[%s5 + $0x70] sm:$0xff]
  %v133 = vld [vmem:[%s5 + $0x78] sm:$0xff]
  %v134 = vld [vmem:[%s6] sm:$0x1]
  %v136 = vperm.slane %v134, 0
  %138 = vmatpush.msra.mxu0 %v133
  %139 = vmatpush.msra.mxu0 %v132
  %140 = vmatpush.msra.mxu0 %v131
  %141 = vmatpush.msra.mxu0 %v130
  %142 = vmatpush.msra.mxu0 %v129
  %143 = vmatpush.msra.mxu0 %v128
  %144 = vmatpush.msra.mxu0 %v127
  %145 = vmatpush.msra.mxu0 %v126
  %146 = vmatpush.msra.mxu0 %v125
  %147 = vmatpush.msra.mxu0 %v124
  %148 = vmatpush.msra.mxu0 %v123
  %149 = vmatpush.msra.mxu0 %v122
  %150 = vmatpush.msra.mxu0 %v121
  %151 = vmatpush.msra.mxu0 %v120
  %152 = vmatpush.msra.mxu0 %v119
  %153 = vmatpush.msra.mxu0 %v118
  %154 = vmatmul.f32.gmra.mxu0 %v116
  %v155 = vpop.f32.mrf.mxu0
  %v156 = vadd.f32 %v136, %v155
  %157 = vmatmul.f32.gmra.mxu0 %v117
  %v158 = vpop.f32.mrf.mxu0
  %v159 = vadd.f32 %v136, %v158
  %160 = vdwg.mxu0
  %161 = vst [vmem:[%s7] sm:$0xff] %v156
  %162 = vst [vmem:[%s7 + $0x8] sm:$0xff] %v159
  // Predicated region
  $region30: #{potentialnet_fc_forward.1} parent=0 // pred_check
    _
  $region31: #{potentialnet_fc_forward.1} parent=0 // pred_check_branch
    %164 = sbr.rel (0) target = $region33
  $region32: #{potentialnet_fc_forward.1} parent=0 // pred_region
    _
  $region33: #{potentialnet_fc_forward.1} parent=0 // pred_fallthru
    _
  // Predicated region
  $region34: #{potentialnet_fc_forward.1} parent=0 // pred_check
    _
  $region35: #{potentialnet_fc_forward.1} parent=0 // pred_check_branch
    %166 = sbr.rel (0) target = $region37
  $region36: #{potentialnet_fc_forward.1} parent=0 // pred_region
    _
  $region37: #{potentialnet_fc_forward.1} parent=0 // pred_fallthru
    _

</llo_original>
